<compile_context>
chip_gen: v7x
topology: tpu7x:2x2x1
jax: 0.10.0
libtpu: 0.0.40
codegen_flags: <defaults>
</compile_context>

<pallas_src>
import functools

import jax
import jax.numpy as jnp
from jax.experimental import pallas as pl
from jax.experimental.pallas import tpu as pltpu

# Shapes implied by the module's reshape(1, 1792, 14, 1) / reshape(1, 32, 14, 14):
C_IN, H, W = 128, 14, 14
C_OUT, K = 32, 3
P = H * W  # 196 flattened spatial positions (h-major, w-minor)

# shift_direction in the torch module is a random +/-1 chosen at __init__;
# fixed deterministically here (both directions are exercised in __main__).
SHIFT = 1


def conv_kernel(x_ref, w_ref, o_ref):
    """Single MXU pass: (C_OUT, K*C_IN) @ (K*C_IN, P) -> (C_OUT, P), f32 acc."""
    o_ref[...] = jnp.dot(w_ref[...], x_ref[...],
                         preferred_element_type=jnp.float32)


@functools.partial(jax.jit, static_argnames=("shift",))
def forward(x_nchw, weights, shift=SHIFT):
    # x_nchw: (1, 128, 14, 14) f32;  weights: (32, 3, 128) f32  (j, k, i)
    #
    # The output H-roll commutes with the W-only conv, so fold both rolls
    # into a single input roll along (H, W).
    x2 = jnp.roll(x_nchw[0], shift, axis=(1, 2))                   # (128, 14, 14)
    # im2col along W, zero padding 1, 3 taps; rows ordered tap-major /
    # channel-minor to match weights.reshape(32, 3*128).
    xp = jnp.pad(x2, ((0, 0), (0, 0), (1, 1)))                     # (128, 14, 16)
    im2col = jnp.concatenate([xp[:, :, k:k + W] for k in range(K)],
                             axis=0).reshape(K * C_IN, P)          # (384, 196)
    w2 = weights.reshape(C_OUT, K * C_IN)                          # (32, 384)

    out_flat = pl.pallas_call(
        conv_kernel,
        out_shape=jax.ShapeDtypeStruct((C_OUT, P), jnp.float32),
        in_specs=[pl.BlockSpec(memory_space=pltpu.MemorySpace.VMEM),
                  pl.BlockSpec(memory_space=pltpu.MemorySpace.VMEM)],
        out_specs=pl.BlockSpec(memory_space=pltpu.MemorySpace.VMEM),
    )(im2col, w2)
    return out_flat.reshape(1, C_OUT, H, W)                        # free reshape


def reference(x_nchw, weights, shift):
    """Pure-JAX reference matching the PyTorch module's semantics."""
    xr = jnp.roll(x_nchw, shift, axis=3)
    xp = jnp.pad(xr, ((0, 0), (0, 0), (0, 0), (1, 1)))
    taps = jnp.stack([xp[..., k:k + W] for k in range(K)], axis=0)  # (3,1,128,14,14)
    y = jnp.einsum('jki,kbihw->bjhw', weights, taps,
                   precision=jax.lax.Precision.HIGHEST)
    return jnp.roll(y, shift, axis=2)


if __name__ == "__main__":
    key = jax.random.PRNGKey(0)
    kx, kw = jax.random.split(key)
    # Shapes are dictated by the module's hard-coded reshapes.
    x = jax.random.normal(kx, (1, C_IN, H, W), jnp.float32)
    # Deterministic stand-in for torch.randn([32, 3, 128]).
    weights = jax.random.normal(kw, (C_OUT, K, C_IN), jnp.float32)

    # The torch module picks shift_direction = +/-1 at __init__; check both.
    for s in (1, -1):
        out = forward(x, weights, shift=s)
        jax.block_until_ready(out)
        ref = reference(x, weights, s)
        assert out.shape == (1, C_OUT, H, W)
        err = float(jnp.max(jnp.abs(out - ref)))
        assert jnp.allclose(out, ref, atol=5e-3, rtol=5e-3), err
    print("KERNEL_OK")
</pallas_src>

<mosaic_0001>
module attributes {stable_mosaic.version = 11 : i64} {
  func.func @conv_kernel(%arg0: memref<384x196xf32, #tpu.memory_space<vmem>>, %arg1: memref<32x384xf32, #tpu.memory_space<vmem>>, %arg2: memref<32x196xf32, #tpu.memory_space<vmem>>) attributes {dimension_semantics = [], scalar_prefetch = 0 : i64, scratch_operands = 0 : i64, tpu.core_type = #tpu.core_type<tc>} {
    %c0 = arith.constant 0 : index
    %c0_0 = arith.constant 0 : index
    %0 = vector.load %arg1[%c0, %c0_0] : memref<32x384xf32, #tpu.memory_space<vmem>>, vector<32x384xf32>
    %c0_1 = arith.constant 0 : index
    %c0_2 = arith.constant 0 : index
    %1 = vector.load %arg0[%c0_1, %c0_2] : memref<384x196xf32, #tpu.memory_space<vmem>>, vector<384x196xf32>
    %cst = arith.constant dense<0.000000e+00> : vector<32x196xf32>
    %2 = tpu.matmul %0, %1, %cst {dimension_numbers = #tpu.dot_dimension_numbers<[1], [0], [0], [1], [0, 0, 1, 1], [], []>} : vector<32x384xf32>, vector<384x196xf32>, vector<32x196xf32> -> vector<32x196xf32>
    %c0_3 = arith.constant 0 : index
    %c0_4 = arith.constant 0 : index
    %3 = vector.load %arg2[%c0_3, %c0_4] : memref<32x196xf32, #tpu.memory_space<vmem>>, vector<32x196xf32>
    tpu.vector_store %arg2[%c0_3, %c0_4], %2 {strides = array<i32>} : memref<32x196xf32, #tpu.memory_space<vmem>>, vector<32x196xf32>,
    return
  }
}

</mosaic_0001>

<llo_original>
// kernel: forward.1
$region0: #{forward.1}
  #allocation0 [shape = 'u32[]', space=smem, size = 0x4, offset = 0x4, fixed_abs, tag = 'smem constant byte address 0x4 - core index']
  #allocation1 [shape = 'u32[144,128]{1,0:T(1,128)}', space=vmem, size = 0x12000, scoped, tag = 'internal scratch']
  %s0 = inlined_call_operand.vmem [shape: f32[384,196], index: 0, kind: input, shape index: {}]
  %s1 = inlined_call_operand.vmem [shape: f32[32,384], index: 1, kind: input, shape index: {}]
  %s2 = inlined_call_operand.vmem [shape: f32[32,196], index: 2, kind: output, shape index: {}]
  %s3 = sld [smem:[#allocation0]]
  $region18: #{forward.1} parent=0
    _
  %s5 = ssub.s32 1, %s3
  %s6 = scalar_select 0, %s5, %s3
  // Predicated region
  $region2: #{forward.1} parent=0 // pred_check
    _
  $region3: #{forward.1} parent=0 // pred_check_branch
    %8 = sbr.rel (0) target = $region5
  $region4: #{forward.1} parent=0 // pred_region
    _
  $region5: #{forward.1} parent=0 // pred_fallthru
    _
  // Predicated region
  $region6: #{forward.1} parent=0 // pred_check
    _
  $region7: #{forward.1} parent=0 // pred_check_branch
    %10 = sbr.rel (0) target = $region9
  $region8: #{forward.1} parent=0 // pred_region
    _
  $region9: #{forward.1} parent=0 // pred_fallthru
    _
  %v11 = vld [vmem:[%s1] sm:$0xff]
  %v12 = vld [vmem:[%s1 + $0x8] sm:$0xff]
  %v13 = vld [vmem:[%s1 + $0x10] sm:$0xff]
  %v14 = vld [vmem:[%s1 + $0x18] sm:$0xff]
  %v15 = vld [vmem:[%s1 + $0x20] sm:$0xff]
  %v16 = vld [vmem:[%s1 + $0x28] sm:$0xff]
  %v17 = vld [vmem:[%s1 + $0x30] sm:$0xff]
  %v18 = vld [vmem:[%s1 + $0x38] sm:$0xff]
  %v19 = vld [vmem:[%s1 + $0x40] sm:$0xff]
  %v20 = vld [vmem:[%s1 + $0x48] sm:$0xff]
  %v21 = vld [vmem:[%s1 + $0x50] sm:$0xff]
  %v22 = vld [vmem:[%s1 + $0x58] sm:$0xff]
  %v23 = vld [vmem:[%s0] sm:$0xff]
  %v24 = vld [vmem:[%s0 + $0x8] sm:$0xff]
  %v25 = vld [vmem:[%s0 + $0x10] sm:$0xff]
  %v26 = vld [vmem:[%s0 + $0x18] sm:$0xff]
  %v27 = vld [vmem:[%s0 + $0x20] sm:$0xff]
  %v28 = vld [vmem:[%s0 + $0x28] sm:$0xff]
  %v29 = vld [vmem:[%s0 + $0x30] sm:$0xff]
  %v30 = vld [vmem:[%s0 + $0x38] sm:$0xff]
  %v31 = vld [vmem:[%s0 + $0x40] sm:$0xff]
  %v32 = vld [vmem:[%s0 + $0x48] sm:$0xff]
  %v33 = vld [vmem:[%s0 + $0x50] sm:$0xff]
  %v34 = vld [vmem:[%s0 + $0x58] sm:$0xff]
  %v35 = vld [vmem:[%s0 + $0x60] sm:$0xff]
  %v36 = vld [vmem:[%s0 + $0x68] sm:$0xff]
  %v37 = vld [vmem:[%s0 + $0x70] sm:$0xff]
  %v38 = vld [vmem:[%s0 + $0x78] sm:$0xff]
  %v39 = vld [vmem:[%s0 + $0x80] sm:$0xff]
  %v40 = vld [vmem:[%s0 + $0x88] sm:$0xff]
  %v41 = vld [vmem:[%s0 + $0x90] sm:$0xff]
  %v42 = vld [vmem:[%s0 + $0x98] sm:$0xff]
  %v43 = vld [vmem:[%s0 + $0xa0] sm:$0xff]
  %v44 = vld [vmem:[%s0 + $0xa8] sm:$0xff]
  %v45 = vld [vmem:[%s0 + $0xb0] sm:$0xff]
  %v46 = vld [vmem:[%s0 + $0xb8] sm:$0xff]
  %v47 = vld [vmem:[%s0 + $0xc0] sm:$0xff]
  %v48 = vld [vmem:[%s0 + $0xc8] sm:$0xff]
  %v49 = vld [vmem:[%s0 + $0xd0] sm:$0xff]
  %v50 = vld [vmem:[%s0 + $0xd8] sm:$0xff]
  %v51 = vld [vmem:[%s0 + $0xe0] sm:$0xff]
  %v52 = vld [vmem:[%s0 + $0xe8] sm:$0xff]
  %v53 = vld [vmem:[%s0 + $0xf0] sm:$0xff]
  %v54 = vld [vmem:[%s0 + $0xf8] sm:$0xff]
  %v55 = vld [vmem:[%s0 + $0x100] sm:$0xff]
  %v56 = vld [vmem:[%s0 + $0x108] sm:$0xff]
  %v57 = vld [vmem:[%s0 + $0x110] sm:$0xff]
  %v58 = vld [vmem:[%s0 + $0x118] sm:$0xff]
  %v59 = vld [vmem:[%s0 + $0x120] sm:$0xff]
  %v60 = vld [vmem:[%s0 + $0x128] sm:$0xff]
  %v61 = vld [vmem:[%s0 + $0x130] sm:$0xff]
  %v62 = vld [vmem:[%s0 + $0x138] sm:$0xff]
  %v63 = vld [vmem:[%s0 + $0x140] sm:$0xff]
  %v64 = vld [vmem:[%s0 + $0x148] sm:$0xff]
  %v65 = vld [vmem:[%s0 + $0x150] sm:$0xff]
  %v66 = vld [vmem:[%s0 + $0x158] sm:$0xff]
  %v67 = vld [vmem:[%s0 + $0x160] sm:$0xff]
  %v68 = vld [vmem:[%s0 + $0x168] sm:$0xff]
  %v69 = vld [vmem:[%s0 + $0x170] sm:$0xff]
  %v70 = vld [vmem:[%s0 + $0x178] sm:$0xff]
  %v71 = vld [vmem:[%s0 + $0x180] sm:$0xff]
  %v72 = vld [vmem:[%s0 + $0x188] sm:$0xff]
  %v73 = vld [vmem:[%s0 + $0x190] sm:$0xff]
  %v74 = vld [vmem:[%s0 + $0x198] sm:$0xff]
  %v75 = vld [vmem:[%s0 + $0x1a0] sm:$0xff]
  %v76 = vld [vmem:[%s0 + $0x1a8] sm:$0xff]
  %v77 = vld [vmem:[%s0 + $0x1b0] sm:$0xff]
  %v78 = vld [vmem:[%s0 + $0x1b8] sm:$0xff]
  %v79 = vld [vmem:[%s0 + $0x1c0] sm:$0xff]
  %v80 = vld [vmem:[%s0 + $0x1c8] sm:$0xff]
  %v81 = vld [vmem:[%s0 + $0x1d0] sm:$0xff]
  %v82 = vld [vmem:[%s0 + $0x1d8] sm:$0xff]
  %v83 = vld [vmem:[%s0 + $0x1e0] sm:$0xff]
  %v84 = vld [vmem:[%s0 + $0x1e8] sm:$0xff]
  %v85 = vld [vmem:[%s0 + $0x1f0] sm:$0xff]
  %v86 = vld [vmem:[%s0 + $0x1f8] sm:$0xff]
  %v87 = vld [vmem:[%s0 + $0x200] sm:$0xff]
  %v88 = vld [vmem:[%s0 + $0x208] sm:$0xff]
  %v89 = vld [vmem:[%s0 + $0x210] sm:$0xff]
  %v90 = vld [vmem:[%s0 + $0x218] sm:$0xff]
  %v91 = vld [vmem:[%s0 + $0x220] sm:$0xff]
  %v92 = vld [vmem:[%s0 + $0x228] sm:$0xff]
  %v93 = vld [vmem:[%s0 + $0x230] sm:$0xff]
  %v94 = vld [vmem:[%s0 + $0x238] sm:$0xff]
  %v95 = vld [vmem:[%s0 + $0x240] sm:$0xff]
  %v96 = vld [vmem:[%s0 + $0x248] sm:$0xff]
  %v97 = vld [vmem:[%s0 + $0x250] sm:$0xff]
  %v98 = vld [vmem:[%s0 + $0x258] sm:$0xff]
  %v99 = vld [vmem:[%s0 + $0x260] sm:$0xff]
  %v100 = vld [vmem:[%s0 + $0x268] sm:$0xff]
  %v101 = vld [vmem:[%s0 + $0x270] sm:$0xff]
  %v102 = vld [vmem:[%s0 + $0x278] sm:$0xff]
  %v103 = vld [vmem:[%s0 + $0x280] sm:$0xff]
  %v104 = vld [vmem:[%s0 + $0x288] sm:$0xff]
  %v105 = vld [vmem:[%s0 + $0x290] sm:$0xff]
  %v106 = vld [vmem:[%s0 + $0x298] sm:$0xff]
  %v107 = vld [vmem:[%s0 + $0x2a0] sm:$0xff]
  %v108 = vld [vmem:[%s0 + $0x2a8] sm:$0xff]
  %v109 = vld [vmem:[%s0 + $0x2b0] sm:$0xff]
  %v110 = vld [vmem:[%s0 + $0x2b8] sm:$0xff]
  %v111 = vld [vmem:[%s0 + $0x2c0] sm:$0xff]
  %v112 = vld [vmem:[%s0 + $0x2c8] sm:$0xff]
  %v113 = vld [vmem:[%s0 + $0x2d0] sm:$0xff]
  %v114 = vld [vmem:[%s0 + $0x2d8] sm:$0xff]
  %v115 = vld [vmem:[%s0 + $0x2e0] sm:$0xff]
  %v116 = vld [vmem:[%s0 + $0x2e8] sm:$0xff]
  %v117 = vld [vmem:[%s0 + $0x2f0] sm:$0xff]
  %v118 = vld [vmem:[%s0 + $0x2f8] sm:$0xff]
  %119 = vmatprep.subr.mxu0 %v24
  %120 = vmatpush1.msra.mxu0 %v23
  %121 = vmatprep.subr.mxu0 %v26
  %122 = vmatpush1.msra.mxu0 %v25
  %123 = vmatprep.subr.mxu0 %v28
  %124 = vmatpush1.msra.mxu0 %v27
  %125 = vmatprep.subr.mxu0 %v30
  %126 = vmatpush1.msra.mxu0 %v29
  %127 = vmatprep.subr.mxu0 %v32
  %128 = vmatpush1.msra.mxu0 %v31
  %129 = vmatprep.subr.mxu0 %v34
  %130 = vmatpush1.msra.mxu0 %v33
  %131 = vmatprep.subr.mxu0 %v36
  %132 = vmatpush1.msra.mxu0 %v35
  %133 = vmatprep.subr.mxu0 %v38
  %134 = vmatpush1.msra.mxu0 %v37
  %135 = vmatprep.subr.mxu0 %v40
  %136 = vmatpush1.msra.mxu0 %v39
  %137 = vmatprep.subr.mxu0 %v42
  %138 = vmatpush1.msra.mxu0 %v41
  %139 = vmatprep.subr.mxu0 %v44
  %140 = vmatpush1.msra.mxu0 %v43
  %141 = vmatprep.subr.mxu0 %v46
  %142 = vmatpush1.msra.mxu0 %v45
  %143 = vmatprep.subr.mxu0 %v48
  %144 = vmatpush1.msra.mxu0 %v47
  %145 = vmatprep.subr.mxu0 %v50
  %146 = vmatpush1.msra.mxu0 %v49
  %147 = vmatprep.subr.mxu0 %v52
  %148 = vmatpush1.msra.mxu0 %v51
  %149 = vmatprep.subr.mxu0 %v54
  %150 = vmatpush1.msra.mxu0 %v53
  %151 = vmatprep.subr.mxu0 %v56
  %152 = vmatpush1.msra.mxu0 %v55
  %153 = vmatprep.subr.mxu0 %v58
  %154 = vmatpush1.msra.mxu0 %v57
  %155 = vmatprep.subr.mxu0 %v60
  %156 = vmatpush1.msra.mxu0 %v59
  %157 = vmatprep.subr.mxu0 %v62
  %158 = vmatpush1.msra.mxu0 %v61
  %159 = vmatprep.subr.mxu0 %v64
  %160 = vmatpush1.msra.mxu0 %v63
  %161 = vmatprep.subr.mxu0 %v66
  %162 = vmatpush1.msra.mxu0 %v65
  %163 = vmatprep.subr.mxu0 %v68
  %164 = vmatpush1.msra.mxu0 %v67
  %165 = vmatprep.subr.mxu0 %v70
  %166 = vmatpush1.msra.mxu0 %v69
  %167 = vmatprep.subr.mxu0 %v72
  %168 = vmatpush1.msra.mxu0 %v71
  %169 = vmatprep.subr.mxu0 %v74
  %170 = vmatpush1.msra.mxu0 %v73
  %171 = vmatprep.subr.mxu0 %v76
  %172 = vmatpush1.msra.mxu0 %v75
  %173 = vmatprep.subr.mxu0 %v78
  %174 = vmatpush1.msra.mxu0 %v77
  %175 = vmatprep.subr.mxu0 %v80
  %176 = vmatpush1.msra.mxu0 %v79
  %177 = vmatprep.subr.mxu0 %v82
  %178 = vmatpush1.msra.mxu0 %v81
  %179 = vmatprep.subr.mxu0 %v84
  %180 = vmatpush1.msra.mxu0 %v83
  %181 = vmatprep.subr.mxu0 %v86
  %182 = vmatpush1.msra.mxu0 %v85
  %183 = vmatprep.mubr.f32.mxu0 %v12
  %184 = vmatmul.mubr.f32.gmra.mrb[0].mxu0 %v11
  %v185 = vpop.f32.mrb[0].mxu0
  %v186 = vadd.f32 0.0, %v185
  %v187 = vpop.f32.mrb[0].mxu0
  %v188 = vadd.f32 0.0, %v187
  %189 = vmatprep.mubr.f32.mxu0 %v15
  %190 = vmatmul.mubr.f32.gmra.mrb[0].mxu0 %v14
  %v191 = vpop.f32.mrb[0].mxu0
  %v192 = vadd.f32 0.0, %v191
  %v193 = vpop.f32.mrb[0].mxu0
  %v194 = vadd.f32 0.0, %v193
  %195 = vmatprep.mubr.f32.mxu0 %v18
  %196 = vmatmul.mubr.f32.gmra.mrb[0].mxu0 %v17
  %v197 = vpop.f32.mrb[0].mxu0
  %v198 = vadd.f32 0.0, %v197
  %v199 = vpop.f32.mrb[0].mxu0
  %v200 = vadd.f32 0.0, %v199
  %201 = vmatprep.mubr.f32.mxu0 %v21
  %202 = vmatmul.mubr.f32.gmra.mrb[0].mxu0 %v20
  %v203 = vpop.f32.mrb[0].mxu0
  %v204 = vadd.f32 0.0, %v203
  %v205 = vpop.f32.mrb[0].mxu0
  %v206 = vadd.f32 0.0, %v205
  %207 = vdwg.mxu0
  %208 = vmatprep.subr.mxu0 %v88
  %209 = vmatpush1.msra.mxu0 %v87
  %210 = vmatprep.subr.mxu0 %v90
  %211 = vmatpush1.msra.mxu0 %v89
  %212 = vmatprep.subr.mxu0 %v92
  %213 = vmatpush1.msra.mxu0 %v91
  %214 = vmatprep.subr.mxu0 %v94
  %215 = vmatpush1.msra.mxu0 %v93
  %216 = vmatprep.subr.mxu0 %v96
  %217 = vmatpush1.msra.mxu0 %v95
  %218 = vmatprep.subr.mxu0 %v98
  %219 = vmatpush1.msra.mxu0 %v97
  %220 = vmatprep.subr.mxu0 %v100
  %221 = vmatpush1.msra.mxu0 %v99
  %222 = vmatprep.subr.mxu0 %v102
  %223 = vmatpush1.msra.mxu0 %v101
  %224 = vmatprep.subr.mxu0 %v104
  %225 = vmatpush1.msra.mxu0 %v103
  %226 = vmatprep.subr.mxu0 %v106
  %227 = vmatpush1.msra.mxu0 %v105
  %228 = vmatprep.subr.mxu0 %v108
  %229 = vmatpush1.msra.mxu0 %v107
  %230 = vmatprep.subr.mxu0 %v110
  %231 = vmatpush1.msra.mxu0 %v109
  %232 = vmatprep.subr.mxu0 %v112
  %233 = vmatpush1.msra.mxu0 %v111
  %234 = vmatprep.subr.mxu0 %v114
  %235 = vmatpush1.msra.mxu0 %v113
  %236 = vmatprep.subr.mxu0 %v116
  %237 = vmatpush1.msra.mxu0 %v115
  %238 = vmatprep.subr.mxu0 %v118
  %239 = vmatpush1.msra.mxu0 %v117
  %240 = vmatprep.subr.mxu0 0.0
  %241 = vmatpush1.msra.mxu0 0.0
  %242 = vmatprep.subr.mxu0 0.0
  %243 = vmatpush1.msra.mxu0 0.0
  %244 = vmatprep.subr.mxu0 0.0
  %245 = vmatpush1.msra.mxu0 0.0
  %246 = vmatprep.subr.mxu0 0.0
  %247 = vmatpush1.msra.mxu0 0.0
  %248 = vmatprep.subr.mxu0 0.0
  %249 = vmatpush1.msra.mxu0 0.0
  %250 = vmatprep.subr.mxu0 0.0
  %251 = vmatpush1.msra.mxu0 0.0
  %252 = vmatprep.subr.mxu0 0.0
  %253 = vmatpush1.msra.mxu0 0.0
  %254 = vmatprep.subr.mxu0 0.0
  %255 = vmatpush1.msra.mxu0 0.0
  %256 = vmatprep.subr.mxu0 0.0
  %257 = vmatpush1.msra.mxu0 0.0
  %258 = vmatprep.subr.mxu0 0.0
  %259 = vmatpush1.msra.mxu0 0.0
  %260 = vmatprep.subr.mxu0 0.0
  %261 = vmatpush1.msra.mxu0 0.0
  %262 = vmatprep.subr.mxu0 0.0
  %263 = vmatpush1.msra.mxu0 0.0
  %264 = vmatprep.subr.mxu0 0.0
  %265 = vmatpush1.msra.mxu0 0.0
  %266 = vmatprep.subr.mxu0 0.0
  %267 = vmatpush1.msra.mxu0 0.0
  %268 = vmatprep.subr.mxu0 0.0
  %269 = vmatpush1.msra.mxu0 0.0
  %270 = vmatprep.subr.mxu0 0.0
  %271 = vmatpush1.msra.mxu0 0.0
  %272 = vmatprep.mubr.f32.mxu0 0.0
  %273 = vmatmul.mubr.f32.gmra.mrb[0].mxu0 %v13
  %v274 = vpop.f32.mrb[0].mxu0
  %v275 = vadd.f32 %v186, %v274
  %v276 = vpop.f32.mrb[0].mxu0
  %v277 = vadd.f32 %v188, %v276
  %278 = vmatprep.mubr.f32.mxu0 0.0
  %279 = vmatmul.mubr.f32.gmra.mrb[0].mxu0 %v16
  %v280 = vpop.f32.mrb[0].mxu0
  %v281 = vadd.f32 %v192, %v280
  %v282 = vpop.f32.mrb[0].mxu0
  %v283 = vadd.f32 %v194, %v282
  %284 = vmatprep.mubr.f32.mxu0 0.0
  %285 = vmatmul.mubr.f32.gmra.mrb[0].mxu0 %v19
  %v286 = vpop.f32.mrb[0].mxu0
  %v287 = vadd.f32 %v198, %v286
  %v288 = vpop.f32.mrb[0].mxu0
  %v289 = vadd.f32 %v200, %v288
  %290 = vmatprep.mubr.f32.mxu0 0.0
  %291 = vmatmul.mubr.f32.gmra.mrb[0].mxu0 %v22
  %v292 = vpop.f32.mrb[0].mxu0
  %v293 = vadd.f32 %v204, %v292
  %v294 = vpop.f32.mrb[0].mxu0
  %v295 = vadd.f32 %v206, %v294
  %296 = vdwg.mxu0
  %297 = vst [vmem:[%s2] sm:$0xff] %v275
  %vm298 = vcmask 556032
  %299 = vst.msk [vmem:[%s2 + $0x8] sm:$0xff] %vm298, %v277
  %300 = vst [vmem:[%s2 + $0x10] sm:$0xff] %v281
  %301 = vst.msk [vmem:[%s2 + $0x18] sm:$0xff] %vm298, %v283
  %302 = vst [vmem:[%s2 + $0x20] sm:$0xff] %v287
  %303 = vst.msk [vmem:[%s2 + $0x28] sm:$0xff] %vm298, %v289
  %304 = vst [vmem:[%s2 + $0x30] sm:$0xff] %v293
  %305 = vst.msk [vmem:[%s2 + $0x38] sm:$0xff] %vm298, %v295
  // Predicated region
  $region10: #{forward.1} parent=0 // pred_check
    _
  $region11: #{forward.1} parent=0 // pred_check_branch
    %307 = sbr.rel (0) target = $region13
  $region12: #{forward.1} parent=0 // pred_region
    _
  $region13: #{forward.1} parent=0 // pred_fallthru
    _
  // Predicated region
  $region14: #{forward.1} parent=0 // pred_check
    _
  $region15: #{forward.1} parent=0 // pred_check_branch
    %309 = sbr.rel (0) target = $region17
  $region16: #{forward.1} parent=0 // pred_region
    _
  $region17: #{forward.1} parent=0 // pred_fallthru
    _

</llo_original>
